<compile_context>
chip_gen: v7x
topology: tpu7x:2x2x1
jax: 0.10.0
libtpu: 0.0.40
codegen_flags: <defaults>
</compile_context>

<pallas_src>
import jax
import jax.numpy as jnp
from jax.experimental import pallas as pl
from jax.experimental.pallas import tpu as pltpu


def _round_up(x: int, m: int) -> int:
    return ((x + m - 1) // m) * m


def _fused_noisy_linear_kernel(x_ref, n_ref, w_ref, b_ref, o_ref):
    """o[i,j] = sum_k (x[i,k] + noise[i,k]) @ W[k,j] + b[j]   (bf16 MXU, f32 acc)."""
    k = pl.program_id(2)

    @pl.when(k == 0)
    def _():
        o_ref[...] = jnp.zeros_like(o_ref)

    # Fused elementwise add + bf16 cast feeding the MXU; accumulate in f32
    # directly in the (resident) output block.
    xb = (x_ref[...] + n_ref[...]).astype(jnp.bfloat16)
    o_ref[...] += jnp.dot(xb, w_ref[...], preferred_element_type=jnp.float32)

    @pl.when(k == pl.num_programs(2) - 1)
    def _():
        o_ref[...] += b_ref[...]


def init_linear_params(weight, bias):
    """One-time pad + bf16 cast of nn.Linear params (cache across forwards)."""
    Out, In = weight.shape
    in_p = _round_up(In, 128)
    out_p = _round_up(Out, 128)
    w_p = jnp.zeros((in_p, out_p), jnp.bfloat16).at[:In, :Out].set(
        weight.T.astype(jnp.bfloat16))
    b_p = jnp.zeros((1, out_p), jnp.float32).at[:, :Out].set(
        jnp.asarray(bias, jnp.float32).reshape(1, Out))
    return {"w_p": w_p, "b_p": b_p, "in_size": In, "out_size": Out}


def model_forward(x, params, key, *, i_batch=0, verbose=False):
    """Pallas equivalent of Model.forward.

    x      : [B, In] f32
    params : output of init_linear_params
    key    : jax PRNG key for the per-forward randn noise
    returns: (output [B, Out] f32, noise [B, In] f32)
    """
    B, In = x.shape
    assert In == params["in_size"]
    Out = params["out_size"]
    w_p, b_p = params["w_p"], params["b_p"]
    in_p, out_p = w_p.shape

    # torch.randn(batch_size, input_size) equivalent (host-side JAX PRNG).
    noise = jax.random.normal(key, (B, In), dtype=jnp.float32)

    # Tile sizes: lane-dense, (8,128)-aligned; >=2 M tiles for B>=16 (v7x cores).
    if B >= 16:
        tm = min(256, _round_up(pl.cdiv(B, 2), 8))
    else:
        tm = _round_up(B, 8)
    m_p = _round_up(B, tm)

    if out_p <= 256:
        tn = out_p
    else:
        tn = 256 if out_p % 256 == 0 else 128

    if in_p <= 512:
        tk = in_p
    else:
        tk = 512 if in_p % 512 == 0 else (256 if in_p % 256 == 0 else 128)

    grid = (m_p // tm, out_p // tn, in_p // tk)

    # Pad only the per-call activations (weight/bias already padded in init).
    if (m_p, in_p) == (B, In):
        x_p, n_p = x, noise
    else:
        x_p = jnp.zeros((m_p, in_p), jnp.float32).at[:B, :In].set(x)
        n_p = jnp.zeros((m_p, in_p), jnp.float32).at[:B, :In].set(noise)

    cost = pl.CostEstimate(
        flops=2 * m_p * in_p * out_p,
        transcendentals=0,
        bytes_accessed=(2 * m_p * in_p * 4          # x + noise reads
                        + in_p * out_p * 2          # bf16 weight read
                        + m_p * out_p * 4           # output write
                        + out_p * 4),               # bias read
    )

    # Double-buffered per-tile VMEM footprint, with headroom.
    tile_bytes = 2 * (2 * tm * tk * 4 + tk * tn * 2 + tn * 4) + 2 * tm * tn * 4
    vmem_limit = int(min(100 * 1024 * 1024, max(16 * 1024 * 1024, 4 * tile_bytes)))

    out_pad = pl.pallas_call(
        _fused_noisy_linear_kernel,
        out_shape=jax.ShapeDtypeStruct((m_p, out_p), jnp.float32),
        grid_spec=pltpu.PrefetchScalarGridSpec(
            num_scalar_prefetch=0,
            grid=grid,
            in_specs=[
                pl.BlockSpec((tm, tk), lambda i, j, k: (i, k)),   # x
                pl.BlockSpec((tm, tk), lambda i, j, k: (i, k)),   # noise
                pl.BlockSpec((tk, tn), lambda i, j, k: (k, j)),   # W (bf16)
                pl.BlockSpec((1, tn), lambda i, j, k: (0, j)),    # bias
            ],
            out_specs=pl.BlockSpec((tm, tn), lambda i, j, k: (i, j)),
        ),
        compiler_params=pltpu.CompilerParams(
            dimension_semantics=("parallel", "parallel", "arbitrary"),
            vmem_limit_bytes=vmem_limit,
        ),
        cost_estimate=cost,
    )(x_p, n_p, w_p, b_p)

    if verbose:
        # TODO(synk): torch.cuda.current_device()/get_device_name() have no
        # TPU-kernel equivalent; device bookkeeping stays on the host.
        print(f"=== Batch {i_batch}-th computed with Pallas TPU kernel on "
              f"{jax.devices()[0]} ===")

    return out_pad[:B, :Out], noise


if __name__ == "__main__":
    input_size = 32
    output_size = 16
    batch = 8

    key = jax.random.PRNGKey(0)
    k_x, k_w, k_b, k_noise = jax.random.split(key, 4)

    x = jax.random.normal(k_x, (batch, input_size), dtype=jnp.float32)

    # nn.Linear-style init: uniform(-1/sqrt(in), 1/sqrt(in)).
    bound = float(input_size) ** -0.5
    weight = jax.random.uniform(k_w, (output_size, input_size), dtype=jnp.float32,
                                minval=-bound, maxval=bound)
    bias = jax.random.uniform(k_b, (1, output_size), dtype=jnp.float32,
                              minval=-bound, maxval=bound)

    params = init_linear_params(weight, bias)
    out, noise = model_forward(x, params, k_noise, i_batch=0)
    out = jax.block_until_ready(out)

    # Reference: same bf16-rounded operands, f32 accumulate.
    xn = (x + noise).astype(jnp.bfloat16).astype(jnp.float32)
    wt = weight.T.astype(jnp.bfloat16).astype(jnp.float32)
    ref = xn @ wt + bias

    assert out.shape == (batch, output_size)
    assert noise.shape == (batch, input_size)
    assert bool(jnp.all(jnp.isfinite(out)))
    err = float(jnp.max(jnp.abs(out - ref)))
    assert jnp.allclose(out, ref, atol=1e-3, rtol=1e-3), err
    # Sanity check on the randn noise: roughly zero-mean / unit-variance.
    assert abs(float(noise.mean())) < 0.5
    assert 0.5 < float(noise.std()) < 1.5

    print("KERNEL_OK")
</pallas_src>

<mosaic_0001>
module attributes {stable_mosaic.version = 11 : i64} {
  func.func @_fused_noisy_linear_kernel(%arg0: i32, %arg1: i32, %arg2: i32, %arg3: memref<8x128xf32, #tpu.memory_space<vmem>>, %arg4: memref<8x128xf32, #tpu.memory_space<vmem>>, %arg5: memref<128x128xbf16, #tpu.memory_space<vmem>>, %arg6: memref<1x128xf32, #tpu.memory_space<vmem>>, %arg7: memref<8x128xf32, #tpu.memory_space<vmem>>) attributes {dimension_semantics = [#tpu.dimension_semantics<parallel>, #tpu.dimension_semantics<parallel>, #tpu.dimension_semantics<arbitrary>], iteration_bounds = array<i64: 1, 1, 1>, scalar_prefetch = 0 : i64, scratch_operands = 0 : i64, tpu.core_type = #tpu.core_type<tc>, window_params = [{transform_indices = @transform_0, window_bounds = array<i64: 8, 128>}, {transform_indices = @transform_1, window_bounds = array<i64: 8, 128>}, {transform_indices = @transform_2, window_bounds = array<i64: 128, 128>}, {transform_indices = @transform_3, window_bounds = array<i64: 1, 128>}, {transform_indices = @transform_4, window_bounds = array<i64: 8, 128>}]} {
    %c0_i32 = arith.constant 0 : i32
    %0 = arith.cmpi eq, %arg2, %c0_i32 : i32
    %1 = arith.extui %0 : i1 to i32
    %c0_i32_0 = arith.constant 0 : i32
    %2 = arith.cmpi ne, %1, %c0_i32_0 : i32
    scf.if %2 {
      %cst_12 = arith.constant 0.000000e+00 : f32
      %15 = vector.broadcast %cst_12 : f32 to vector<8x128xf32>
      %c0_13 = arith.constant 0 : index
      %c0_14 = arith.constant 0 : index
      %16 = vector.load %arg7[%c0_13, %c0_14] : memref<8x128xf32, #tpu.memory_space<vmem>>, vector<8x128xf32>
      tpu.vector_store %arg7[%c0_13, %c0_14], %15 {strides = array<i32>} : memref<8x128xf32, #tpu.memory_space<vmem>>, vector<8x128xf32>,
    } else {
    }
    %c0 = arith.constant 0 : index
    %c0_1 = arith.constant 0 : index
    %3 = vector.load %arg3[%c0, %c0_1] : memref<8x128xf32, #tpu.memory_space<vmem>>, vector<8x128xf32>
    %c0_2 = arith.constant 0 : index
    %c0_3 = arith.constant 0 : index
    %4 = vector.load %arg4[%c0_2, %c0_3] : memref<8x128xf32, #tpu.memory_space<vmem>>, vector<8x128xf32>
    %5 = arith.addf %3, %4 : vector<8x128xf32>
    %6 = arith.truncf %5 : vector<8x128xf32> to vector<8x128xbf16>
    %c0_4 = arith.constant 0 : index
    %c0_5 = arith.constant 0 : index
    %7 = vector.load %arg7[%c0_4, %c0_5] : memref<8x128xf32, #tpu.memory_space<vmem>>, vector<8x128xf32>
    %c0_6 = arith.constant 0 : index
    %c0_7 = arith.constant 0 : index
    %8 = vector.load %arg5[%c0_6, %c0_7] : memref<128x128xbf16, #tpu.memory_space<vmem>>, vector<128x128xbf16>
    %cst = arith.constant dense<0.000000e+00> : vector<8x128xf32>
    %9 = tpu.matmul %6, %8, %cst {dimension_numbers = #tpu.dot_dimension_numbers<[1], [0], [0], [1], [0, 0, 1, 1], [], []>} : vector<8x128xbf16>, vector<128x128xbf16>, vector<8x128xf32> -> vector<8x128xf32>
    %10 = arith.addf %7, %9 : vector<8x128xf32>
    %c0_8 = arith.constant 0 : index
    %c0_9 = arith.constant 0 : index
    %11 = vector.load %arg7[%c0_8, %c0_9] : memref<8x128xf32, #tpu.memory_space<vmem>>, vector<8x128xf32>
    tpu.vector_store %arg7[%c0_8, %c0_9], %10 {strides = array<i32>} : memref<8x128xf32, #tpu.memory_space<vmem>>, vector<8x128xf32>,
    %c0_i32_10 = arith.constant 0 : i32
    %12 = arith.cmpi eq, %arg2, %c0_i32_10 : i32
    %13 = arith.extui %12 : i1 to i32
    %c0_i32_11 = arith.constant 0 : i32
    %14 = arith.cmpi ne, %13, %c0_i32_11 : i32
    scf.if %14 {
      %c0_12 = arith.constant 0 : index
      %c0_13 = arith.constant 0 : index
      %15 = vector.load %arg7[%c0_12, %c0_13] : memref<8x128xf32, #tpu.memory_space<vmem>>, vector<8x128xf32>
      %c0_14 = arith.constant 0 : index
      %c0_15 = arith.constant 0 : index
      %16 = vector.load %arg6[%c0_14, %c0_15] : memref<1x128xf32, #tpu.memory_space<vmem>>, vector<1x128xf32>
      %17 = vector.broadcast %16 : vector<1x128xf32> to vector<8x128xf32>
      %18 = arith.addf %15, %17 : vector<8x128xf32>
      %c0_16 = arith.constant 0 : index
      %c0_17 = arith.constant 0 : index
      %19 = vector.load %arg7[%c0_16, %c0_17] : memref<8x128xf32, #tpu.memory_space<vmem>>, vector<8x128xf32>
      tpu.vector_store %arg7[%c0_16, %c0_17], %18 {strides = array<i32>} : memref<8x128xf32, #tpu.memory_space<vmem>>, vector<8x128xf32>,
    } else {
    }
    return
  }
  func.func @transform_0(%arg0: i32, %arg1: i32, %arg2: i32) -> (i32, i32) {
    %c0_i32 = arith.constant 0 : i32
    return %arg0, %arg2 : i32, i32
  }
  func.func @transform_1(%arg0: i32, %arg1: i32, %arg2: i32) -> (i32, i32) {
    %c0_i32 = arith.constant 0 : i32
    return %arg0, %arg2 : i32, i32
  }
  func.func @transform_2(%arg0: i32, %arg1: i32, %arg2: i32) -> (i32, i32) {
    %c0_i32 = arith.constant 0 : i32
    return %arg2, %arg1 : i32, i32
  }
  func.func @transform_3(%arg0: i32, %arg1: i32, %arg2: i32) -> (i32, i32) {
    %c0_i32 = arith.constant 0 : i32
    %c0_i32_0 = arith.constant 0 : i32
    return %c0_i32, %arg1 : i32, i32
  }
  func.func @transform_4(%arg0: i32, %arg1: i32, %arg2: i32) -> (i32, i32) {
    %c0_i32 = arith.constant 0 : i32
    return %arg0, %arg1 : i32, i32
  }
}

</mosaic_0001>

<llo_original>
// kernel: tpu_custom_call.1
$region0: #{tpu_custom_call.1}
  #allocation0 [shape = 'u32[]', space=smem, size = 0x4, offset = 0x4, fixed_abs, tag = 'smem constant byte address 0x4 - core index']
  #allocation1 [shape = 'u32[144,128]{1,0:T(1,128)}', space=vmem, size = 0x12000, scoped, tag = 'internal scratch']
  %s0 = inlined_call_operand.hbm [shape: f32[8,128], index: 0, kind: input, shape index: {}]
  %s1 = inlined_call_operand.hbm [shape: f32[8,128], index: 1, kind: input, shape index: {}]
  %s2 = inlined_call_operand.hbm [shape: bf16[128,128], index: 2, kind: input, shape index: {}]
  %s3 = inlined_call_operand.vmem [shape: f32[1,128], index: 3, kind: input, shape index: {}]
  %s4 = inlined_call_operand.hbm [shape: f32[8,128], index: 4, kind: output, shape index: {}]
  %s5 = sld [smem:[#allocation0]]
  $region46: #{tpu_custom_call.1} parent=0
    _
  %s7 = ssub.s32 1, %s5
  %s8 = scalar_select 0, %s7, %s5
  $region1: #{tpu_custom_call.1} parent=0
    #allocation2 [shape = 'u8[4096]{0}', space=vmem, size = 0x1000, scoped, tag = 'input window, operand 0, single buffered']
    #allocation3 [shape = 's32[1]{0}', space=sflag, size = 0x4, scoped, tag = 'scoped memory for tpu_custom_call.1']
    #allocation4 [shape = 's32[1]{0}', space=sflag, size = 0x4, scoped, tag = 'scoped memory for tpu_custom_call.1']
    #allocation5 [shape = 'u8[4096]{0}', space=vmem, size = 0x1000, scoped, tag = 'input window, operand 1, single buffered']
    #allocation6 [shape = 's32[1]{0}', space=sflag, size = 0x4, scoped, tag = 'scoped memory for tpu_custom_call.1']
    #allocation7 [shape = 'u8[32768]{0}', space=vmem, size = 0x8000, scoped, tag = 'input window, operand 2, single buffered']
    #allocation8 [shape = 'u8[4096]{0}', space=vmem, size = 0x1000, scoped, tag = 'output window, operand 0, single buffered']
    %9 = vsyncpa [#allocation3], 0
    %10 = vsyncpa [#allocation6], 0
    %11 = vsyncpa [#allocation4], 0
    // Predicated region
    $region2: #{tpu_custom_call.1} parent=1 // pred_check
      _
    $region3: #{tpu_custom_call.1} parent=1 // pred_check_branch
      %13 = sbr.rel (0) target = $region5
    $region4: #{tpu_custom_call.1} parent=1 // pred_region
      %s15 = ssub.s32 128, 128
      %16 = vsyncadd [#allocation3], %s15
      %s18 = sshll.u32 [#allocation2], 4
      %s19 = int_to_ptr.vmem [resolvable:$true] %s18
      %21 = dma.hbm_to_vmem [thread:$0]  %s0, 128, %s19, [#allocation3]
    $region5: #{tpu_custom_call.1} parent=1 // pred_fallthru
      _
    // Predicated region
    $region6: #{tpu_custom_call.1} parent=1 // pred_check
      _
    $region7: #{tpu_custom_call.1} parent=1 // pred_check_branch
      %23 = sbr.rel (0) target = $region9
    $region8: #{tpu_custom_call.1} parent=1 // pred_region
      %s25 = ssub.s32 128, 128
      %26 = vsyncadd [#allocation6], %s25
      %s28 = sshll.u32 [#allocation5], 4
      %s29 = int_to_ptr.vmem [resolvable:$true] %s28
      %31 = dma.hbm_to_vmem [thread:$0]  %s1, 128, %s29, [#allocation6]
    $region9: #{tpu_custom_call.1} parent=1 // pred_fallthru
      _
    // Predicated region
    $region10: #{tpu_custom_call.1} parent=1 // pred_check
      _
    $region11: #{tpu_custom_call.1} parent=1 // pred_check_branch
      %33 = sbr.rel (0) target = $region13
    $region12: #{tpu_custom_call.1} parent=1 // pred_region
      %s35 = ssub.s32 1024, 1024
      %36 = vsyncadd [#allocation6], %s35
      %s37 = sshll.u32 [#allocation7], 4
      %s38 = int_to_ptr.vmem [resolvable:$true] %s37
      %43 = dma.hbm_to_vmem [thread:$0]  %s2, 1024, %s38, [#allocation6], 64, 64, 4
    $region13: #{tpu_custom_call.1} parent=1 // pred_fallthru
      _
    // Predicated region
    $region14: #{tpu_custom_call.1} parent=1 // pred_check
      _
    $region15: #{tpu_custom_call.1} parent=1 // pred_check_branch
      %45 = sbr.rel (0) target = $region17
    $region16: #{tpu_custom_call.1} parent=1 // pred_region
      _
    $region17: #{tpu_custom_call.1} parent=1 // pred_fallthru
      _
    // Predicated region
    $region18: #{tpu_custom_call.1} parent=1 // pred_check
      _
    $region19: #{tpu_custom_call.1} parent=1 // pred_check_branch
      %47 = sbr.rel (0) target = $region21
    $region20: #{tpu_custom_call.1} parent=1 // pred_region
      %48 = dma.done [#allocation3], 128
    $region21: #{tpu_custom_call.1} parent=1 // pred_fallthru
      _
    // Predicated region
    $region22: #{tpu_custom_call.1} parent=1 // pred_check
      _
    $region23: #{tpu_custom_call.1} parent=1 // pred_check_branch
      %50 = sbr.rel (0) target = $region25
    $region24: #{tpu_custom_call.1} parent=1 // pred_region
      %51 = dma.done [#allocation6], 128
    $region25: #{tpu_custom_call.1} parent=1 // pred_fallthru
      _
    // Predicated region
    $region26: #{tpu_custom_call.1} parent=1 // pred_check
      _
    $region27: #{tpu_custom_call.1} parent=1 // pred_check_branch
      %53 = sbr.rel (0) target = $region29
    $region28: #{tpu_custom_call.1} parent=1 // pred_region
      %54 = dma.done [#allocation6], 1024
    $region29: #{tpu_custom_call.1} parent=1 // pred_fallthru
      _
    %p56 = scmp.eq.s32.totalorder 0, 0
    // Predicated region
    $region30: #{tpu_custom_call.1} parent=1 // pred_check
      %p57 = pneg %p56
    $region31: #{tpu_custom_call.1} parent=1 // pred_check_branch
      %59 = sbr.rel (%p57) target = $region33
    $region32: #{tpu_custom_call.1} parent=1 // pred_region
      %60 = vst [vmem:[#allocation8] sm:$0xff] 0.0
    $region33: #{tpu_custom_call.1} parent=1 // pred_fallthru
      _
    %v61 = vld [vmem:[#allocation2] sm:$0xff]
    %v62 = vld [vmem:[#allocation5] sm:$0xff]
    %v63 = vadd.f32 %v61, %v62
    %v64 = vpack.c.bf16 %v63, %v63
    %v65 = vld [vmem:[#allocation8] sm:$0xff]
    %v66 = vld [vmem:[#allocation7] sm:$0xf]
    %v67 = vld [vmem:[#allocation7 + $0x4] sm:$0xf]
    %v68 = vld [vmem:[#allocation7 + $0x8] sm:$0xf]
    %v69 = vld [vmem:[#allocation7 + $0xc] sm:$0xf]
    %v70 = vld [vmem:[#allocation7 + $0x10] sm:$0xf]
    %v71 = vld [vmem:[#allocation7 + $0x14] sm:$0xf]
    %v72 = vld [vmem:[#allocation7 + $0x18] sm:$0xf]
    %v73 = vld [vmem:[#allocation7 + $0x1c] sm:$0xf]
    %v74 = vld [vmem:[#allocation7 + $0x20] sm:$0xf]
    %v75 = vld [vmem:[#allocation7 + $0x24] sm:$0xf]
    %v76 = vld [vmem:[#allocation7 + $0x28] sm:$0xf]
    %v77 = vld [vmem:[#allocation7 + $0x2c] sm:$0xf]
    %v78 = vld [vmem:[#allocation7 + $0x30] sm:$0xf]
    %v79 = vld [vmem:[#allocation7 + $0x34] sm:$0xf]
    %v80 = vld [vmem:[#allocation7 + $0x38] sm:$0xf]
    %v81 = vld [vmem:[#allocation7 + $0x3c] sm:$0xf]
    %v98 = vunpack.c.l.b16 %v66
    %v99 = vunpack.c.l.b16 %v67
    %v100 = vunpack.c.l.b16 %v68
    %v101 = vunpack.c.l.b16 %v69
    %v102 = vunpack.c.l.b16 %v70
    %v103 = vunpack.c.l.b16 %v71
    %v104 = vunpack.c.l.b16 %v72
    %v105 = vunpack.c.l.b16 %v73
    %v106 = vunpack.c.l.b16 %v74
    %v107 = vunpack.c.l.b16 %v75
    %v108 = vunpack.c.l.b16 %v76
    %v109 = vunpack.c.l.b16 %v77
    %v110 = vunpack.c.l.b16 %v78
    %v111 = vunpack.c.l.b16 %v79
    %v112 = vunpack.c.l.b16 %v80
    %v113 = vunpack.c.l.b16 %v81
    %v114 = vpack.c.b16 %v99, %v98
    %v115 = vpack.c.b16 %v101, %v100
    %v116 = vpack.c.b16 %v103, %v102
    %v117 = vpack.c.b16 %v105, %v104
    %v118 = vpack.c.b16 %v107, %v106
    %v119 = vpack.c.b16 %v109, %v108
    %v120 = vpack.c.b16 %v111, %v110
    %v121 = vpack.c.b16 %v113, %v112
    %130 = vmatprep.subr.bf16.mxu0 0
    %131 = vmatpush1.bf16.msra.mxu0 %v114
    %132 = vmatprep.subr.bf16.mxu0 0
    %133 = vmatpush1.bf16.msra.mxu0 %v115
    %134 = vmatprep.subr.bf16.mxu0 0
    %135 = vmatpush1.bf16.msra.mxu0 %v116
    %136 = vmatprep.subr.bf16.mxu0 0
    %137 = vmatpush1.bf16.msra.mxu0 %v117
    %138 = vmatprep.subr.bf16.mxu0 0
    %139 = vmatpush1.bf16.msra.mxu0 %v118
    %140 = vmatprep.subr.bf16.mxu0 0
    %141 = vmatpush1.bf16.msra.mxu0 %v119
    %142 = vmatprep.subr.bf16.mxu0 0
    %143 = vmatpush1.bf16.msra.mxu0 %v120
    %144 = vmatprep.subr.bf16.mxu0 0
    %145 = vmatpush1.bf16.msra.mxu0 %v121
    %146 = vmatprep.subr.bf16.mxu0 0
    %147 = vmatpush1.bf16.msra.mxu0 0
    %148 = vmatprep.subr.bf16.mxu0 0
    %149 = vmatpush1.bf16.msra.mxu0 0
    %150 = vmatprep.subr.bf16.mxu0 0
    %151 = vmatpush1.bf16.msra.mxu0 0
    %152 = vmatprep.subr.bf16.mxu0 0
    %153 = vmatpush1.bf16.msra.mxu0 0
    %154 = vmatprep.subr.bf16.mxu0 0
    %155 = vmatpush1.bf16.msra.mxu0 0
    %156 = vmatprep.subr.bf16.mxu0 0
    %157 = vmatpush1.bf16.msra.mxu0 0
    %158 = vmatprep.subr.bf16.mxu0 0
    %159 = vmatpush1.bf16.msra.mxu0 0
    %160 = vmatprep.subr.bf16.mxu0 0
    %161 = vmatpush1.bf16.msra.mxu0 0
    %162 = vmatprep.mubr.bf16.mxu0 0
    %163 = vmatmul.mubr.bf16.gmra.mrb[0].mxu0 %v64
    %v164 = vpop.f32.mrb[0].mxu0
    %v165 = vadd.f32 0.0, %v164
    %v166 = vpop.f32.mrb[0].mxu0
    %v167 = vpop.f32.mrb[0].mxu0
    %v168 = vpop.f32.mrb[0].mxu0
    %169 = vdwg.mxu0
    %v170 = vadd.f32 %v65, %v165
    %171 = vst [vmem:[#allocation8] sm:$0xff] %v170
    // Predicated region
    $region34: #{tpu_custom_call.1} parent=1 // pred_check
      %p172 = pneg %p56
    $region35: #{tpu_custom_call.1} parent=1 // pred_check_branch
      %174 = sbr.rel (%p172) target = $region37
    $region36: #{tpu_custom_call.1} parent=1 // pred_region
      %v175 = vld [vmem:[#allocation8] sm:$0xff]
      %v176 = vld [vmem:[%s3] sm:$0x1]
      %v178 = vlaneseq
      %v179 = vshrl.u32 %v178, 7
      %v180 = vsub.s32 0, %v179
      %v181 = vrot.slane %v176, %v180
      %v183 = vadd.f32 %v175, %v181
      %184 = vst [vmem:[#allocation8] sm:$0xff] %v183
    $region37: #{tpu_custom_call.1} parent=1 // pred_fallthru
      _
    // Predicated region
    $region38: #{tpu_custom_call.1} parent=1 // pred_check
      _
    $region39: #{tpu_custom_call.1} parent=1 // pred_check_branch
      %186 = sbr.rel (0) target = $region41
    $region40: #{tpu_custom_call.1} parent=1 // pred_region
      %s188 = ssub.s32 128, 128
      %189 = vsyncadd [#allocation4], %s188
      %s191 = sshll.u32 [#allocation8], 4
      %s192 = int_to_ptr.vmem [resolvable:$true] %s191
      %194 = dma.vmem_to_hbm [thread:$0]  %s192, 128, %s4, [#allocation4]
    $region41: #{tpu_custom_call.1} parent=1 // pred_fallthru
      _
    // Predicated region
    $region42: #{tpu_custom_call.1} parent=1 // pred_check
      _
    $region43: #{tpu_custom_call.1} parent=1 // pred_check_branch
      %196 = sbr.rel (0) target = $region45
    $region44: #{tpu_custom_call.1} parent=1 // pred_region
      %197 = dma.done [#allocation4], 128
    $region45: #{tpu_custom_call.1} parent=1 // pred_fallthru
      _
    %198 = vsyncpa [#allocation3], 1
    %199 = vsyncpa [#allocation6], 1
    %200 = vsyncpa [#allocation4], 1

</llo_original>
